<compile_context>
chip_gen: v5e
topology: v5e:2x2
jax: 0.10.0
libtpu: 0.0.40
codegen_flags: <defaults>
</compile_context>

<pallas_src>
import functools

import jax
import jax.numpy as jnp
from jax.experimental import pallas as pl
from jax.experimental.pallas import tpu as pltpu


def _round_up(x, m):
    return ((x + m - 1) // m) * m


def _sage_fused_kernel(a_ref, x_ref, w1_ref, b1_ref, w2_ref, b2_ref, o_ref):
    """Both SAGEConv('mean') layers fused on-chip.

    a_ref  : [NP, NP]        row-normalized (mean) adjacency, zero padded
    x_ref  : [NP, INP]       node features, zero padded
    w1_ref : [2*INP, HIDP]   stack([Ws1; Wn1]) pre-transposed, zero padded
    b1_ref : [1, HIDP]       bias 1
    w2_ref : [HIDP, 2*OUTP]  concat([Ws2 | Wn2]) pre-transposed, zero padded
    b2_ref : [1, OUTP]       bias 2
    o_ref  : [NP, OUTP]      output (padded)
    """
    a = a_ref[...]
    x = x_ref[...]

    # ---- layer 1 (F_in < F_out): aggregate first, then ONE merged projection.
    neigh1 = jnp.dot(a, x, preferred_element_type=jnp.float32)          # [NP, INP]
    z1 = jnp.concatenate([x, neigh1], axis=-1)                          # [NP, 2*INP]
    h = jnp.dot(z1, w1_ref[...], preferred_element_type=jnp.float32) + b1_ref[...]
    h = jnp.maximum(h, 0.0)                                             # relu; h stays in VMEM

    # ---- layer 2 (F_in > F_out): project first (one merged matmul), then
    # aggregate only the small projected tensor with A.
    proj = jnp.dot(h, w2_ref[...], preferred_element_type=jnp.float32)  # [NP, 2*OUTP]
    outp = proj.shape[-1] // 2
    p_self = proj[:, :outp]
    p_neigh = proj[:, outp:]
    out = p_self + jnp.dot(a, p_neigh, preferred_element_type=jnp.float32) + b2_ref[...]
    o_ref[...] = out.astype(o_ref.dtype)


def sage_forward(a_mean, x, params):
    """Full SAGE forward (conv1 -> relu -> conv2) in a single fused pallas_call."""
    n, in_f = x.shape
    hid_f = params["ws1"].shape[1]
    out_f = params["ws2"].shape[1]

    # Pad node and feature dims to multiples of 128 -> lane-dense tiles,
    # unmasked stores.  At these sizes everything fits in a handful of vregs.
    np_ = _round_up(n, 128)
    inp = _round_up(in_f, 128)
    hidp = _round_up(hid_f, 128)
    outp = _round_up(out_f, 128)

    a_p = jnp.zeros((np_, np_), jnp.float32).at[:n, :n].set(a_mean)
    x_p = jnp.zeros((np_, inp), jnp.float32).at[:n, :in_f].set(x)

    # Merged layer-1 weight:  [x | A@x] @ [[Ws1], [Wn1]]
    w1 = jnp.zeros((2 * inp, hidp), jnp.float32)
    w1 = w1.at[:in_f, :hid_f].set(params["ws1"])
    w1 = w1.at[inp:inp + in_f, :hid_f].set(params["wn1"])
    b1 = jnp.zeros((1, hidp), jnp.float32).at[:, :hid_f].set(params["b1"])

    # Merged layer-2 weight:  h @ [Ws2 | Wn2]; aggregation applied after projection.
    w2 = jnp.zeros((hidp, 2 * outp), jnp.float32)
    w2 = w2.at[:hid_f, :out_f].set(params["ws2"])
    w2 = w2.at[:hid_f, outp:outp + out_f].set(params["wn2"])
    b2 = jnp.zeros((1, outp), jnp.float32).at[:, :out_f].set(params["b2"])

    out_p = pl.pallas_call(
        _sage_fused_kernel,
        out_shape=jax.ShapeDtypeStruct((np_, outp), jnp.float32),
        grid=(1,),
        in_specs=[
            pl.BlockSpec((np_, np_), lambda i: (0, 0)),
            pl.BlockSpec((np_, inp), lambda i: (0, 0)),
            pl.BlockSpec((2 * inp, hidp), lambda i: (0, 0)),
            pl.BlockSpec((1, hidp), lambda i: (0, 0)),
            pl.BlockSpec((hidp, 2 * outp), lambda i: (0, 0)),
            pl.BlockSpec((1, outp), lambda i: (0, 0)),
        ],
        out_specs=pl.BlockSpec((np_, outp), lambda i: (0, 0)),
        compiler_params=pltpu.CompilerParams(
            dimension_semantics=("arbitrary",),
            vmem_limit_bytes=64 * 1024 * 1024,
        ),
    )(a_p, x_p, w1, b1, w2, b2)

    return out_p[:n, :out_f]


def build_mean_adjacency(key, n_nodes):
    """Deterministic synthetic undirected graph (Karate-club-like), row-mean-normalized."""
    a = jax.random.bernoulli(key, p=0.15, shape=(n_nodes, n_nodes)).astype(jnp.float32)
    a = jnp.maximum(a, a.T)                                   # symmetrize (undirected)
    a = a * (1.0 - jnp.eye(n_nodes, dtype=jnp.float32))       # no self loops
    deg = jnp.sum(a, axis=1, keepdims=True)
    safe_deg = jnp.maximum(deg, 1.0)                          # isolated nodes -> mean = 0
    return a / safe_deg


def init_params(key, in_feats, hid_feats, out_feats):
    """Deterministic parameter init matching DGL SAGEConv shapes.

    DGL: fc_self / fc_neigh are Linear(in, out, bias=False) with weight [out, in];
    stored pre-transposed as [in, out] for the kernel. Bias kept as [1, out].
    """
    k = jax.random.split(key, 4)
    scale1 = 1.0 / jnp.sqrt(jnp.float32(in_feats))
    scale2 = 1.0 / jnp.sqrt(jnp.float32(hid_feats))
    return {
        "ws1": jax.random.normal(k[0], (in_feats, hid_feats), jnp.float32) * scale1,
        "wn1": jax.random.normal(k[1], (in_feats, hid_feats), jnp.float32) * scale1,
        "b1": jnp.zeros((1, hid_feats), jnp.float32),
        "ws2": jax.random.normal(k[2], (hid_feats, out_feats), jnp.float32) * scale2,
        "wn2": jax.random.normal(k[3], (hid_feats, out_feats), jnp.float32) * scale2,
        "b2": jnp.zeros((1, out_feats), jnp.float32),
    }


def reference_forward(a_mean, x, params):
    """Pure-JAX reference of the same semantics (sanity check)."""
    h = x @ params["ws1"] + (a_mean @ x) @ params["wn1"] + params["b1"]
    h = jnp.maximum(h, 0.0)
    return h @ params["ws2"] + (a_mean @ h) @ params["wn2"] + params["b2"]


if __name__ == "__main__":
    # Small Karate-club-like setup: 34 nodes, 16 input feats, 32 hidden, 4 output.
    N, IN_FEATS, HID_FEATS, OUT_FEATS = 34, 16, 32, 4

    root = jax.random.PRNGKey(0)
    k_graph, k_feat, k_param = jax.random.split(root, 3)

    a_mean = build_mean_adjacency(k_graph, N)                  # [N, N]
    x = jax.random.normal(k_feat, (N, IN_FEATS), jnp.float32)  # [N, F_in]
    params = init_params(k_param, IN_FEATS, HID_FEATS, OUT_FEATS)

    out = sage_forward(a_mean, x, params)
    out = jax.block_until_ready(out)

    ref = reference_forward(a_mean, x, params)
    assert out.shape == (N, OUT_FEATS)
    assert jnp.allclose(out, ref, atol=1e-4, rtol=1e-4)

    print("KERNEL_OK")
</pallas_src>

<mosaic_0001>
module attributes {stable_mosaic.version = 11 : i64} {
  func.func @_sage_fused_kernel(%arg0: i32, %arg1: memref<128x128xf32, #tpu.memory_space<vmem>>, %arg2: memref<128x128xf32, #tpu.memory_space<vmem>>, %arg3: memref<256x128xf32, #tpu.memory_space<vmem>>, %arg4: memref<1x128xf32, #tpu.memory_space<vmem>>, %arg5: memref<128x256xf32, #tpu.memory_space<vmem>>, %arg6: memref<1x128xf32, #tpu.memory_space<vmem>>, %arg7: memref<128x128xf32, #tpu.memory_space<vmem>>) attributes {dimension_semantics = [#tpu.dimension_semantics<arbitrary>], iteration_bounds = array<i64: 1>, scalar_prefetch = 0 : i64, scratch_operands = 0 : i64, tpu.core_type = #tpu.core_type<tc>, window_params = [{pipeline_mode = #tpu.pipeline_mode<synchronous>, transform_indices = @transform_0, window_bounds = array<i64: 128, 128>}, {pipeline_mode = #tpu.pipeline_mode<synchronous>, transform_indices = @transform_1, window_bounds = array<i64: 128, 128>}, {pipeline_mode = #tpu.pipeline_mode<synchronous>, transform_indices = @transform_2, window_bounds = array<i64: 256, 128>}, {pipeline_mode = #tpu.pipeline_mode<synchronous>, transform_indices = @transform_3, window_bounds = array<i64: 1, 128>}, {pipeline_mode = #tpu.pipeline_mode<synchronous>, transform_indices = @transform_4, window_bounds = array<i64: 128, 256>}, {pipeline_mode = #tpu.pipeline_mode<synchronous>, transform_indices = @transform_5, window_bounds = array<i64: 1, 128>}, {pipeline_mode = #tpu.pipeline_mode<synchronous>, transform_indices = @transform_6, window_bounds = array<i64: 128, 128>}]} {
    %c0 = arith.constant 0 : index
    %c0_0 = arith.constant 0 : index
    %0 = vector.load %arg1[%c0, %c0_0] : memref<128x128xf32, #tpu.memory_space<vmem>>, vector<128x128xf32>
    %c0_1 = arith.constant 0 : index
    %c0_2 = arith.constant 0 : index
    %1 = vector.load %arg2[%c0_1, %c0_2] : memref<128x128xf32, #tpu.memory_space<vmem>>, vector<128x128xf32>
    %cst = arith.constant dense<0.000000e+00> : vector<128x128xf32>
    %2 = tpu.matmul %0, %1, %cst {dimension_numbers = #tpu.dot_dimension_numbers<[1], [0], [0], [1], [0, 0, 1, 1], [], []>} : vector<128x128xf32>, vector<128x128xf32>, vector<128x128xf32> -> vector<128x128xf32>
    %3 = tpu.concatenate %1, %2 in 1 : vector<128x128xf32>, vector<128x128xf32> -> vector<128x256xf32>
    %c0_3 = arith.constant 0 : index
    %c0_4 = arith.constant 0 : index
    %4 = vector.load %arg3[%c0_3, %c0_4] : memref<256x128xf32, #tpu.memory_space<vmem>>, vector<256x128xf32>
    %cst_5 = arith.constant dense<0.000000e+00> : vector<128x128xf32>
    %5 = tpu.matmul %3, %4, %cst_5 {dimension_numbers = #tpu.dot_dimension_numbers<[1], [0], [0], [1], [0, 0, 1, 1], [], []>} : vector<128x256xf32>, vector<256x128xf32>, vector<128x128xf32> -> vector<128x128xf32>
    %c0_6 = arith.constant 0 : index
    %c0_7 = arith.constant 0 : index
    %6 = vector.load %arg4[%c0_6, %c0_7] : memref<1x128xf32, #tpu.memory_space<vmem>>, vector<1x128xf32>
    %7 = vector.broadcast %6 : vector<1x128xf32> to vector<128x128xf32>
    %8 = arith.addf %5, %7 : vector<128x128xf32>
    %cst_8 = arith.constant 0.000000e+00 : f32
    %9 = vector.broadcast %cst_8 : f32 to vector<128x128xf32>
    %10 = arith.maximumf %8, %9 : vector<128x128xf32>
    %c0_9 = arith.constant 0 : index
    %c0_10 = arith.constant 0 : index
    %11 = vector.load %arg5[%c0_9, %c0_10] : memref<128x256xf32, #tpu.memory_space<vmem>>, vector<128x256xf32>
    %cst_11 = arith.constant dense<0.000000e+00> : vector<128x256xf32>
    %12 = tpu.matmul %10, %11, %cst_11 {dimension_numbers = #tpu.dot_dimension_numbers<[1], [0], [0], [1], [0, 0, 1, 1], [], []>} : vector<128x128xf32>, vector<128x256xf32>, vector<128x256xf32> -> vector<128x256xf32>
    %13 = vector.extract_strided_slice %12 {offsets = [0, 0], sizes = [128, 128], strides = [1, 1]} : vector<128x256xf32> to vector<128x128xf32>
    %14 = vector.extract_strided_slice %12 {offsets = [0, 128], sizes = [128, 128], strides = [1, 1]} : vector<128x256xf32> to vector<128x128xf32>
    %cst_12 = arith.constant dense<0.000000e+00> : vector<128x128xf32>
    %15 = tpu.matmul %0, %14, %cst_12 {dimension_numbers = #tpu.dot_dimension_numbers<[1], [0], [0], [1], [0, 0, 1, 1], [], []>} : vector<128x128xf32>, vector<128x128xf32>, vector<128x128xf32> -> vector<128x128xf32>
    %16 = arith.addf %13, %15 : vector<128x128xf32>
    %c0_13 = arith.constant 0 : index
    %c0_14 = arith.constant 0 : index
    %17 = vector.load %arg6[%c0_13, %c0_14] : memref<1x128xf32, #tpu.memory_space<vmem>>, vector<1x128xf32>
    %18 = vector.broadcast %17 : vector<1x128xf32> to vector<128x128xf32>
    %19 = arith.addf %16, %18 : vector<128x128xf32>
    %c0_15 = arith.constant 0 : index
    %c0_16 = arith.constant 0 : index
    %20 = vector.load %arg7[%c0_15, %c0_16] : memref<128x128xf32, #tpu.memory_space<vmem>>, vector<128x128xf32>
    tpu.vector_store %arg7[%c0_15, %c0_16], %19 {strides = array<i32>} : memref<128x128xf32, #tpu.memory_space<vmem>>, vector<128x128xf32>,
    return
  }
  func.func @transform_0(%arg0: i32) -> (i32, i32) {
    %c0_i32 = arith.constant 0 : i32
    %c0_i32_0 = arith.constant 0 : i32
    %c0_i32_1 = arith.constant 0 : i32
    return %c0_i32, %c0_i32_0 : i32, i32
  }
  func.func @transform_1(%arg0: i32) -> (i32, i32) {
    %c0_i32 = arith.constant 0 : i32
    %c0_i32_0 = arith.constant 0 : i32
    %c0_i32_1 = arith.constant 0 : i32
    return %c0_i32, %c0_i32_0 : i32, i32
  }
  func.func @transform_2(%arg0: i32) -> (i32, i32) {
    %c0_i32 = arith.constant 0 : i32
    %c0_i32_0 = arith.constant 0 : i32
    %c0_i32_1 = arith.constant 0 : i32
    return %c0_i32, %c0_i32_0 : i32, i32
  }
  func.func @transform_3(%arg0: i32) -> (i32, i32) {
    %c0_i32 = arith.constant 0 : i32
    %c0_i32_0 = arith.constant 0 : i32
    %c0_i32_1 = arith.constant 0 : i32
    return %c0_i32, %c0_i32_0 : i32, i32
  }
  func.func @transform_4(%arg0: i32) -> (i32, i32) {
    %c0_i32 = arith.constant 0 : i32
    %c0_i32_0 = arith.constant 0 : i32
    %c0_i32_1 = arith.constant 0 : i32
    return %c0_i32, %c0_i32_0 : i32, i32
  }
  func.func @transform_5(%arg0: i32) -> (i32, i32) {
    %c0_i32 = arith.constant 0 : i32
    %c0_i32_0 = arith.constant 0 : i32
    %c0_i32_1 = arith.constant 0 : i32
    return %c0_i32, %c0_i32_0 : i32, i32
  }
  func.func @transform_6(%arg0: i32) -> (i32, i32) {
    %c0_i32 = arith.constant 0 : i32
    %c0_i32_0 = arith.constant 0 : i32
    %c0_i32_1 = arith.constant 0 : i32
    return %c0_i32, %c0_i32_0 : i32, i32
  }
}

</mosaic_0001>

<llo_original>
// kernel: tpu_custom_call.1
$region0: #{tpu_custom_call.1}
  #allocation0 [shape = 'u32[]', space=smem, size = 0x4, offset = 0x4, fixed_abs, tag = 'smem constant byte address 0x4 - core index']
  #allocation1 [shape = 'u32[72,128]{1,0:T(1,128)}', space=vmem, size = 0x9000, scoped, tag = 'internal scratch']
  %s0 = inlined_call_operand.hbm [shape: f32[128,128], index: 0, kind: input, shape index: {}]
  %s1 = inlined_call_operand.hbm [shape: f32[128,128], index: 1, kind: input, shape index: {}]
  %s2 = inlined_call_operand.hbm [shape: f32[256,128], index: 2, kind: input, shape index: {}]
  %s3 = inlined_call_operand.vmem [shape: f32[1,128], index: 3, kind: input, shape index: {}]
  %s4 = inlined_call_operand.hbm [shape: f32[128,256], index: 4, kind: input, shape index: {}]
  %s5 = inlined_call_operand.vmem [shape: f32[1,128], index: 5, kind: input, shape index: {}]
  %s6 = inlined_call_operand.hbm [shape: f32[128,128], index: 6, kind: output, shape index: {}]
  %s7 = sld [smem:[#allocation0]]
  $region50: #{tpu_custom_call.1} parent=0
    _
  %s9 = ssub.s32 1, %s7
  %s10 = scalar_select 0, %s9, %s7
  $region1: #{tpu_custom_call.1} parent=0
    #allocation2 [shape = 'u8[65536]{0}', space=vmem, size = 0x10000, scoped, tag = 'input window, operand 0, single buffered']
    #allocation3 [shape = 's32[1]{0}', space=sflag, size = 0x4, scoped, tag = 'scoped memory for tpu_custom_call.1']
    #allocation4 [shape = 's32[1]{0}', space=sflag, size = 0x4, scoped, tag = 'scoped memory for tpu_custom_call.1']
    #allocation5 [shape = 'u8[65536]{0}', space=vmem, size = 0x10000, scoped, tag = 'input window, operand 1, single buffered']
    #allocation6 [shape = 's32[1]{0}', space=sflag, size = 0x4, scoped, tag = 'scoped memory for tpu_custom_call.1']
    #allocation7 [shape = 'u8[131072]{0}', space=vmem, size = 0x20000, scoped, tag = 'input window, operand 2, single buffered']
    #allocation8 [shape = 'u8[131072]{0}', space=vmem, size = 0x20000, scoped, tag = 'input window, operand 4, single buffered']
    #allocation9 [shape = 's32[1]{0}', space=sflag, size = 0x4, scoped, tag = 'scoped memory for tpu_custom_call.1']
    #allocation10 [shape = 'u8[65536]{0}', space=vmem, size = 0x10000, scoped, tag = 'output window, operand 0, single buffered']
    %11 = vsyncpa [#allocation3], 0
    %12 = vsyncpa [#allocation6], 0
    %13 = vsyncpa [#allocation9], 0
    %14 = vsyncpa [#allocation4], 0
    // Predicated region
    $region2: #{tpu_custom_call.1} parent=1 // pred_check
      _
    $region3: #{tpu_custom_call.1} parent=1 // pred_check_branch
      %16 = sbr.rel (0) target = $region5
    $region4: #{tpu_custom_call.1} parent=1 // pred_region
      %18 = vsyncadd [#allocation3], 0
      %s19 = sshll.u32 %s0, 4
      %s20 = int_to_ptr.hbm [resolvable:$true] %s19
      %s21 = sshll.u32 [#allocation2], 4
      %s22 = int_to_ptr.vmem [resolvable:$true] %s21
      %27 = dma.hbm_to_vmem [thread:$0]  %s20, 2048, %s22, [#allocation3], 128, 128, 8
    $region5: #{tpu_custom_call.1} parent=1 // pred_fallthru
      _
    // Predicated region
    $region6: #{tpu_custom_call.1} parent=1 // pred_check
      _
    $region7: #{tpu_custom_call.1} parent=1 // pred_check_branch
      %29 = sbr.rel (0) target = $region9
    $region8: #{tpu_custom_call.1} parent=1 // pred_region
      %31 = vsyncadd [#allocation6], 0
      %s32 = sshll.u32 %s1, 4
      %s33 = int_to_ptr.hbm [resolvable:$true] %s32
      %s34 = sshll.u32 [#allocation5], 4
      %s35 = int_to_ptr.vmem [resolvable:$true] %s34
      %40 = dma.hbm_to_vmem [thread:$0]  %s33, 2048, %s35, [#allocation6], 128, 128, 8
    $region9: #{tpu_custom_call.1} parent=1 // pred_fallthru
      _
    // Predicated region
    $region10: #{tpu_custom_call.1} parent=1 // pred_check
      _
    $region11: #{tpu_custom_call.1} parent=1 // pred_check_branch
      %42 = sbr.rel (0) target = $region13
    $region12: #{tpu_custom_call.1} parent=1 // pred_region
      %44 = vsyncadd [#allocation6], 0
      %s45 = sshll.u32 %s2, 4
      %s46 = int_to_ptr.hbm [resolvable:$true] %s45
      %s47 = sshll.u32 [#allocation7], 4
      %s48 = int_to_ptr.vmem [resolvable:$true] %s47
      %53 = dma.hbm_to_vmem [thread:$0]  %s46, 4096, %s48, [#allocation6], 128, 128, 8
    $region13: #{tpu_custom_call.1} parent=1 // pred_fallthru
      _
    // Predicated region
    $region14: #{tpu_custom_call.1} parent=1 // pred_check
      _
    $region15: #{tpu_custom_call.1} parent=1 // pred_check_branch
      %55 = sbr.rel (0) target = $region17
    $region16: #{tpu_custom_call.1} parent=1 // pred_region
      _
    $region17: #{tpu_custom_call.1} parent=1 // pred_fallthru
      _
    // Predicated region
    $region18: #{tpu_custom_call.1} parent=1 // pred_check
      _
    $region19: #{tpu_custom_call.1} parent=1 // pred_check_branch
      %57 = sbr.rel (0) target = $region21
    $region20: #{tpu_custom_call.1} parent=1 // pred_region
      %59 = vsyncadd [#allocation9], 0
      %s60 = sshll.u32 %s4, 4
      %s61 = int_to_ptr.hbm [resolvable:$true] %s60
      %s62 = sshll.u32 [#allocation8], 4
      %s63 = int_to_ptr.vmem [resolvable:$true] %s62
      %68 = dma.hbm_to_vmem [thread:$0]  %s61, 4096, %s63, [#allocation9], 256, 256, 16
    $region21: #{tpu_custom_call.1} parent=1 // pred_fallthru
      _
    // Predicated region
    $region22: #{tpu_custom_call.1} parent=1 // pred_check
      _
    $region23: #{tpu_custom_call.1} parent=1 // pred_check_branch
      %70 = sbr.rel (0) target = $region25
    $region24: #{tpu_custom_call.1} parent=1 // pred_region
      _
    $region25: #{tpu_custom_call.1} parent=1 // pred_fallthru
      _
    // Predicated region
    $region26: #{tpu_custom_call.1} parent=1 // pred_check
      _
    $region27: #{tpu_custom_call.1} parent=1 // pred_check_branch
      %72 = sbr.rel (0) target = $region29
    $region28: #{tpu_custom_call.1} parent=1 // pred_region
      %74 = dma.done [#allocation3], 2048
    $region29: #{tpu_custom_call.1} parent=1 // pred_fallthru
      _
    // Predicated region
    $region30: #{tpu_custom_call.1} parent=1 // pred_check
      _
    $region31: #{tpu_custom_call.1} parent=1 // pred_check_branch
      %76 = sbr.rel (0) target = $region33
    $region32: #{tpu_custom_call.1} parent=1 // pred_region
      %78 = dma.done [#allocation6], 2048
    $region33: #{tpu_custom_call.1} parent=1 // pred_fallthru
      _
    // Predicated region
    $region34: #{tpu_custom_call.1} parent=1 // pred_check
      _
    $region35: #{tpu_custom_call.1} parent=1 // pred_check_branch
      %80 = sbr.rel (0) target = $region37
    $region36: #{tpu_custom_call.1} parent=1 // pred_region
      %82 = dma.done [#allocation6], 4096
    $region37: #{tpu_custom_call.1} parent=1 // pred_fallthru
      _
    // Predicated region
    $region38: #{tpu_custom_call.1} parent=1 // pred_check
      _
    $region39: #{tpu_custom_call.1} parent=1 // pred_check_branch
      %84 = sbr.rel (0) target = $region41
    $region40: #{tpu_custom_call.1} parent=1 // pred_region
      %86 = dma.done [#allocation9], 4096
    $region41: #{tpu_custom_call.1} parent=1 // pred_fallthru
      _
    %v87 = vld [vmem:[#allocation2] sm:$0xff]
    %v88 = vld [vmem:[#allocation2 + $0x8] sm:$0xff]
    %v89 = vld [vmem:[#allocation2 + $0x10] sm:$0xff]
    %v90 = vld [vmem:[#allocation2 + $0x18] sm:$0xff]
    %v91 = vld [vmem:[#allocation2 + $0x20] sm:$0xff]
    %v92 = vld [vmem:[#allocation2 + $0x28] sm:$0xff]
    %v93 = vld [vmem:[#allocation2 + $0x30] sm:$0xff]
    %v94 = vld [vmem:[#allocation2 + $0x38] sm:$0xff]
    %v95 = vld [vmem:[#allocation2 + $0x40] sm:$0xff]
    %v96 = vld [vmem:[#allocation2 + $0x48] sm:$0xff]
    %v97 = vld [vmem:[#allocation2 + $0x50] sm:$0xff]
    %v98 = vld [vmem:[#allocation2 + $0x58] sm:$0xff]
    %v99 = vld [vmem:[#allocation2 + $0x60] sm:$0xff]
    %v100 = vld [vmem:[#allocation2 + $0x68] sm:$0xff]
    %v101 = vld [vmem:[#allocation2 + $0x70] sm:$0xff]
    %v102 = vld [vmem:[#allocation2 + $0x78] sm:$0xff]
    %v103 = vld [vmem:[#allocation5] sm:$0xff]
    %v104 = vld [vmem:[#allocation5 + $0x8] sm:$0xff]
    %v105 = vld [vmem:[#allocation5 + $0x10] sm:$0xff]
    %v106 = vld [vmem:[#allocation5 + $0x18] sm:$0xff]
    %v107 = vld [vmem:[#allocation5 + $0x20] sm:$0xff]
    %v108 = vld [vmem:[#allocation5 + $0x28] sm:$0xff]
    %v109 = vld [vmem:[#allocation5 + $0x30] sm:$0xff]
    %v110 = vld [vmem:[#allocation5 + $0x38] sm:$0xff]
    %v111 = vld [vmem:[#allocation5 + $0x40] sm:$0xff]
    %v112 = vld [vmem:[#allocation5 + $0x48] sm:$0xff]
    %v113 = vld [vmem:[#allocation5 + $0x50] sm:$0xff]
    %v114 = vld [vmem:[#allocation5 + $0x58] sm:$0xff]
    %v115 = vld [vmem:[#allocation5 + $0x60] sm:$0xff]
    %v116 = vld [vmem:[#allocation5 + $0x68] sm:$0xff]
    %v117 = vld [vmem:[#allocation5 + $0x70] sm:$0xff]
    %v118 = vld [vmem:[#allocation5 + $0x78] sm:$0xff]
    %119 = vmatpush.msra.mxu0 %v118
    %120 = vmatpush.msra.mxu0 %v117
    %121 = vmatpush.msra.mxu0 %v116
    %122 = vmatpush.msra.mxu0 %v115
    %123 = vmatpush.msra.mxu0 %v114
    %124 = vmatpush.msra.mxu0 %v113
    %125 = vmatpush.msra.mxu0 %v112
    %126 = vmatpush.msra.mxu0 %v111
    %127 = vmatpush.msra.mxu0 %v110
    %128 = vmatpush.msra.mxu0 %v109
    %129 = vmatpush.msra.mxu0 %v108
    %130 = vmatpush.msra.mxu0 %v107
    %131 = vmatpush.msra.mxu0 %v106
    %132 = vmatpush.msra.mxu0 %v105
    %133 = vmatpush.msra.mxu0 %v104
    %134 = vmatpush.msra.mxu0 %v103
    %135 = vmatmul.f32.gmra.mxu0 %v87
    %v136 = vpop.f32.mrf.mxu0
    %v137 = vadd.f32 0.0, %v136
    %138 = vmatmul.f32.gmra.mxu0 %v88
    %v139 = vpop.f32.mrf.mxu0
    %v140 = vadd.f32 0.0, %v139
    %141 = vmatmul.f32.gmra.mxu0 %v89
    %v142 = vpop.f32.mrf.mxu0
    %v143 = vadd.f32 0.0, %v142
    %144 = vmatmul.f32.gmra.mxu0 %v90
    %v145 = vpop.f32.mrf.mxu0
    %v146 = vadd.f32 0.0, %v145
    %147 = vmatmul.f32.gmra.mxu0 %v91
    %v148 = vpop.f32.mrf.mxu0
    %v149 = vadd.f32 0.0, %v148
    %150 = vmatmul.f32.gmra.mxu0 %v92
    %v151 = vpop.f32.mrf.mxu0
    %v152 = vadd.f32 0.0, %v151
    %153 = vmatmul.f32.gmra.mxu0 %v93
    %v154 = vpop.f32.mrf.mxu0
    %v155 = vadd.f32 0.0, %v154
    %156 = vmatmul.f32.gmra.mxu0 %v94
    %v157 = vpop.f32.mrf.mxu0
    %v158 = vadd.f32 0.0, %v157
    %159 = vmatmul.f32.gmra.mxu0 %v95
    %v160 = vpop.f32.mrf.mxu0
    %v161 = vadd.f32 0.0, %v160
    %162 = vmatmul.f32.gmra.mxu0 %v96
    %v163 = vpop.f32.mrf.mxu0
    %v164 = vadd.f32 0.0, %v163
    %165 = vmatmul.f32.gmra.mxu0 %v97
    %v166 = vpop.f32.mrf.mxu0
    %v167 = vadd.f32 0.0, %v166
    %168 = vmatmul.f32.gmra.mxu0 %v98
    %v169 = vpop.f32.mrf.mxu0
    %v170 = vadd.f32 0.0, %v169
    %171 = vmatmul.f32.gmra.mxu0 %v99
    %v172 = vpop.f32.mrf.mxu0
    %v173 = vadd.f32 0.0, %v172
    %174 = vmatmul.f32.gmra.mxu0 %v100
    %v175 = vpop.f32.mrf.mxu0
    %v176 = vadd.f32 0.0, %v175
    %177 = vmatmul.f32.gmra.mxu0 %v101
    %v178 = vpop.f32.mrf.mxu0
    %v179 = vadd.f32 0.0, %v178
    %180 = vmatmul.f32.gmra.mxu0 %v102
    %v181 = vpop.f32.mrf.mxu0
    %v182 = vadd.f32 0.0, %v181
    %183 = vdwg.mxu0
    %v184 = vld [vmem:[#allocation7] sm:$0xff]
    %v185 = vld [vmem:[#allocation7 + $0x8] sm:$0xff]
    %v186 = vld [vmem:[#allocation7 + $0x10] sm:$0xff]
    %v187 = vld [vmem:[#allocation7 + $0x18] sm:$0xff]
    %v188 = vld [vmem:[#allocation7 + $0x20] sm:$0xff]
    %v189 = vld [vmem:[#allocation7 + $0x28] sm:$0xff]
    %v190 = vld [vmem:[#allocation7 + $0x30] sm:$0xff]
    %v191 = vld [vmem:[#allocation7 + $0x38] sm:$0xff]
    %v192 = vld [vmem:[#allocation7 + $0x40] sm:$0xff]
    %v193 = vld [vmem:[#allocation7 + $0x48] sm:$0xff]
    %v194 = vld [vmem:[#allocation7 + $0x50] sm:$0xff]
    %v195 = vld [vmem:[#allocation7 + $0x58] sm:$0xff]
    %v196 = vld [vmem:[#allocation7 + $0x60] sm:$0xff]
    %v197 = vld [vmem:[#allocation7 + $0x68] sm:$0xff]
    %v198 = vld [vmem:[#allocation7 + $0x70] sm:$0xff]
    %v199 = vld [vmem:[#allocation7 + $0x78] sm:$0xff]
    %v200 = vld [vmem:[#allocation7 + $0x80] sm:$0xff]
    %v201 = vld [vmem:[#allocation7 + $0x88] sm:$0xff]
    %v202 = vld [vmem:[#allocation7 + $0x90] sm:$0xff]
    %v203 = vld [vmem:[#allocation7 + $0x98] sm:$0xff]
    %v204 = vld [vmem:[#allocation7 + $0xa0] sm:$0xff]
    %v205 = vld [vmem:[#allocation7 + $0xa8] sm:$0xff]
    %v206 = vld [vmem:[#allocation7 + $0xb0] sm:$0xff]
    %v207 = vld [vmem:[#allocation7 + $0xb8] sm:$0xff]
    %v208 = vld [vmem:[#allocation7 + $0xc0] sm:$0xff]
    %v209 = vld [vmem:[#allocation7 + $0xc8] sm:$0xff]
    %v210 = vld [vmem:[#allocation7 + $0xd0] sm:$0xff]
    %v211 = vld [vmem:[#allocation7 + $0xd8] sm:$0xff]
    %v212 = vld [vmem:[#allocation7 + $0xe0] sm:$0xff]
    %v213 = vld [vmem:[#allocation7 + $0xe8] sm:$0xff]
    %v214 = vld [vmem:[#allocation7 + $0xf0] sm:$0xff]
    %v215 = vld [vmem:[#allocation7 + $0xf8] sm:$0xff]
    %v216 = vld [vmem:[%s3] sm:$0x1]
    %v218 = vperm.slane %v216, 0
    %220 = vmatpush.msra.mxu0 %v199
    %221 = vmatpush.msra.mxu0 %v198
    %222 = vmatpush.msra.mxu0 %v197
    %223 = vmatpush.msra.mxu0 %v196
    %224 = vmatpush.msra.mxu0 %v195
    %225 = vmatpush.msra.mxu0 %v194
    %226 = vmatpush.msra.mxu0 %v193
    %227 = vmatpush.msra.mxu0 %v192
    %228 = vmatpush.msra.mxu0 %v191
    %229 = vmatpush.msra.mxu0 %v190
    %230 = vmatpush.msra.mxu0 %v189
    %231 = vmatpush.msra.mxu0 %v188
    %232 = vmatpush.msra.mxu0 %v187
    %233 = vmatpush.msra.mxu0 %v186
    %234 = vmatpush.msra.mxu0 %v185
    %235 = vmatpush.msra.mxu0 %v184
    %236 = vmatmul.f32.gmra.mxu0 %v103
    %v237 = vpop.f32.mrf.mxu0
    %v238 = vadd.f32 %v218, %v237
    %239 = vmatmul.f32.gmra.mxu0 %v104
    %v240 = vpop.f32.mrf.mxu0
    %v241 = vadd.f32 %v218, %v240
    %242 = vmatmul.f32.gmra.mxu0 %v105
    %v243 = vpop.f32.mrf.mxu0
    %v244 = vadd.f32 %v218, %v243
    %245 = vmatmul.f32.gmra.mxu0 %v106
    %v246 = vpop.f32.mrf.mxu0
    %v247 = vadd.f32 %v218, %v246
    %248 = vmatmul.f32.gmra.mxu0 %v107
    %v249 = vpop.f32.mrf.mxu0
    %v250 = vadd.f32 %v218, %v249
    %251 = vmatmul.f32.gmra.mxu0 %v108
    %v252 = vpop.f32.mrf.mxu0
    %v253 = vadd.f32 %v218, %v252
    %254 = vmatmul.f32.gmra.mxu0 %v109
    %v255 = vpop.f32.mrf.mxu0
    %v256 = vadd.f32 %v218, %v255
    %257 = vmatmul.f32.gmra.mxu0 %v110
    %v258 = vpop.f32.mrf.mxu0
    %v259 = vadd.f32 %v218, %v258
    %260 = vmatmul.f32.gmra.mxu0 %v111
    %v261 = vpop.f32.mrf.mxu0
    %v262 = vadd.f32 %v218, %v261
    %263 = vmatmul.f32.gmra.mxu0 %v112
    %v264 = vpop.f32.mrf.mxu0
    %v265 = vadd.f32 %v218, %v264
    %266 = vmatmul.f32.gmra.mxu0 %v113
    %v267 = vpop.f32.mrf.mxu0
    %v268 = vadd.f32 %v218, %v267
    %269 = vmatmul.f32.gmra.mxu0 %v114
    %v270 = vpop.f32.mrf.mxu0
    %v271 = vadd.f32 %v218, %v270
    %272 = vmatmul.f32.gmra.mxu0 %v115
    %v273 = vpop.f32.mrf.mxu0
    %v274 = vadd.f32 %v218, %v273
    %275 = vmatmul.f32.gmra.mxu0 %v116
    %v276 = vpop.f32.mrf.mxu0
    %v277 = vadd.f32 %v218, %v276
    %278 = vmatmul.f32.gmra.mxu0 %v117
    %v279 = vpop.f32.mrf.mxu0
    %v280 = vadd.f32 %v218, %v279
    %281 = vmatmul.f32.gmra.mxu0 %v118
    %v282 = vpop.f32.mrf.mxu0
    %v283 = vadd.f32 %v218, %v282
    %284 = vdwg.mxu0
    %285 = vmatpush.msra.mxu0 %v215
    %286 = vmatpush.msra.mxu0 %v214
    %287 = vmatpush.msra.mxu0 %v213
    %288 = vmatpush.msra.mxu0 %v212
    %289 = vmatpush.msra.mxu0 %v211
    %290 = vmatpush.msra.mxu0 %v210
    %291 = vmatpush.msra.mxu0 %v209
    %292 = vmatpush.msra.mxu0 %v208
    %293 = vmatpush.msra.mxu0 %v207
    %294 = vmatpush.msra.mxu0 %v206
    %295 = vmatpush.msra.mxu0 %v205
    %296 = vmatpush.msra.mxu0 %v204
    %297 = vmatpush.msra.mxu0 %v203
    %298 = vmatpush.msra.mxu0 %v202
    %299 = vmatpush.msra.mxu0 %v201
    %300 = vmatpush.msra.mxu0 %v200
    %301 = vmatmul.f32.gmra.mxu0 %v137
    %v302 = vpop.f32.mrf.mxu0
    %v303 = vadd.f32 %v238, %v302
    %304 = vmatmul.f32.gmra.mxu0 %v140
    %v305 = vpop.f32.mrf.mxu0
    %v306 = vadd.f32 %v241, %v305
    %307 = vmatmul.f32.gmra.mxu0 %v143
    %v308 = vpop.f32.mrf.mxu0
    %v309 = vadd.f32 %v244, %v308
    %310 = vmatmul.f32.gmra.mxu0 %v146
    %v311 = vpop.f32.mrf.mxu0
    %v312 = vadd.f32 %v247, %v311
    %313 = vmatmul.f32.gmra.mxu0 %v149
    %v314 = vpop.f32.mrf.mxu0
    %v315 = vadd.f32 %v250, %v314
    %316 = vmatmul.f32.gmra.mxu0 %v152
    %v317 = vpop.f32.mrf.mxu0
    %v318 = vadd.f32 %v253, %v317
    %319 = vmatmul.f32.gmra.mxu0 %v155
    %v320 = vpop.f32.mrf.mxu0
    %v321 = vadd.f32 %v256, %v320
    %322 = vmatmul.f32.gmra.mxu0 %v158
    %v323 = vpop.f32.mrf.mxu0
    %v324 = vadd.f32 %v259, %v323
    %325 = vmatmul.f32.gmra.mxu0 %v161
    %v326 = vpop.f32.mrf.mxu0
    %v327 = vadd.f32 %v262, %v326
    %328 = vmatmul.f32.gmra.mxu0 %v164
    %v329 = vpop.f32.mrf.mxu0
    %v330 = vadd.f32 %v265, %v329
    %331 = vmatmul.f32.gmra.mxu0 %v167
    %v332 = vpop.f32.mrf.mxu0
    %v333 = vadd.f32 %v268, %v332
    %334 = vmatmul.f32.gmra.mxu0 %v170
    %v335 = vpop.f32.mrf.mxu0
    %v336 = vadd.f32 %v271, %v335
    %337 = vmatmul.f32.gmra.mxu0 %v173
    %v338 = vpop.f32.mrf.mxu0
    %v339 = vadd.f32 %v274, %v338
    %340 = vmatmul.f32.gmra.mxu0 %v176
    %v341 = vpop.f32.mrf.mxu0
    %v342 = vadd.f32 %v277, %v341
    %343 = vmatmul.f32.gmra.mxu0 %v179
    %v344 = vpop.f32.mrf.mxu0
    %v345 = vadd.f32 %v280, %v344
    %346 = vmatmul.f32.gmra.mxu0 %v182
    %v347 = vpop.f32.mrf.mxu0
    %v348 = vadd.f32 %v283, %v347
    %349 = vdwg.mxu0
    %v350 = vmax.f32 %v303, 0.0
    %v351 = vmax.f32 %v306, 0.0
    %v352 = vmax.f32 %v309, 0.0
    %v353 = vmax.f32 %v312, 0.0
    %v354 = vmax.f32 %v315, 0.0
    %v355 = vmax.f32 %v318, 0.0
    %v356 = vmax.f32 %v321, 0.0
    %v357 = vmax.f32 %v324, 0.0
    %v358 = vmax.f32 %v327, 0.0
    %v359 = vmax.f32 %v330, 0.0
    %v360 = vmax.f32 %v333, 0.0
    %v361 = vmax.f32 %v336, 0.0
    %v362 = vmax.f32 %v339, 0.0
    %v363 = vmax.f32 %v342, 0.0
    %v364 = vmax.f32 %v345, 0.0
    %v365 = vmax.f32 %v348, 0.0
    %v366 = vld [vmem:[#allocation8] sm:$0xff]
    %v367 = vld [vmem:[#allocation8 + $0x8] sm:$0xff]
    %v368 = vld [vmem:[#allocation8 + $0x10] sm:$0xff]
    %v369 = vld [vmem:[#allocation8 + $0x18] sm:$0xff]
    %v370 = vld [vmem:[#allocation8 + $0x20] sm:$0xff]
    %v371 = vld [vmem:[#allocation8 + $0x28] sm:$0xff]
    %v372 = vld [vmem:[#allocation8 + $0x30] sm:$0xff]
    %v373 = vld [vmem:[#allocation8 + $0x38] sm:$0xff]
    %v374 = vld [vmem:[#allocation8 + $0x40] sm:$0xff]
    %v375 = vld [vmem:[#allocation8 + $0x48] sm:$0xff]
    %v376 = vld [vmem:[#allocation8 + $0x50] sm:$0xff]
    %v377 = vld [vmem:[#allocation8 + $0x58] sm:$0xff]
    %v378 = vld [vmem:[#allocation8 + $0x60] sm:$0xff]
    %v379 = vld [vmem:[#allocation8 + $0x68] sm:$0xff]
    %v380 = vld [vmem:[#allocation8 + $0x70] sm:$0xff]
    %v381 = vld [vmem:[#allocation8 + $0x78] sm:$0xff]
    %v382 = vld [vmem:[#allocation8 + $0x80] sm:$0xff]
    %v383 = vld [vmem:[#allocation8 + $0x88] sm:$0xff]
    %v384 = vld [vmem:[#allocation8 + $0x90] sm:$0xff]
    %v385 = vld [vmem:[#allocation8 + $0x98] sm:$0xff]
    %v386 = vld [vmem:[#allocation8 + $0xa0] sm:$0xff]
    %v387 = vld [vmem:[#allocation8 + $0xa8] sm:$0xff]
    %v388 = vld [vmem:[#allocation8 + $0xb0] sm:$0xff]
    %v389 = vld [vmem:[#allocation8 + $0xb8] sm:$0xff]
    %v390 = vld [vmem:[#allocation8 + $0xc0] sm:$0xff]
    %v391 = vld [vmem:[#allocation8 + $0xc8] sm:$0xff]
    %v392 = vld [vmem:[#allocation8 + $0xd0] sm:$0xff]
    %v393 = vld [vmem:[#allocation8 + $0xd8] sm:$0xff]
    %v394 = vld [vmem:[#allocation8 + $0xe0] sm:$0xff]
    %v395 = vld [vmem:[#allocation8 + $0xe8] sm:$0xff]
    %v396 = vld [vmem:[#allocation8 + $0xf0] sm:$0xff]
    %v397 = vld [vmem:[#allocation8 + $0xf8] sm:$0xff]
    %398 = vmatpush.msra.mxu0 %v396
    %399 = vmatpush.msra.mxu0 %v394
    %400 = vmatpush.msra.mxu0 %v392
    %401 = vmatpush.msra.mxu0 %v390
    %402 = vmatpush.msra.mxu0 %v388
    %403 = vmatpush.msra.mxu0 %v386
    %404 = vmatpush.msra.mxu0 %v384
    %405 = vmatpush.msra.mxu0 %v382
    %406 = vmatpush.msra.mxu0 %v380
    %407 = vmatpush.msra.mxu0 %v378
    %408 = vmatpush.msra.mxu0 %v376
    %409 = vmatpush.msra.mxu0 %v374
    %410 = vmatpush.msra.mxu0 %v372
    %411 = vmatpush.msra.mxu0 %v370
    %412 = vmatpush.msra.mxu0 %v368
    %413 = vmatpush.msra.mxu0 %v366
    %414 = vmatmul.f32.gmra.mxu0 %v350
    %v415 = vpop.f32.mrf.mxu0
    %v416 = vadd.f32 0.0, %v415
    %417 = vmatmul.f32.gmra.mxu0 %v351
    %v418 = vpop.f32.mrf.mxu0
    %v419 = vadd.f32 0.0, %v418
    %420 = vmatmul.f32.gmra.mxu0 %v352
    %v421 = vpop.f32.mrf.mxu0
    %v422 = vadd.f32 0.0, %v421
    %423 = vmatmul.f32.gmra.mxu0 %v353
    %v424 = vpop.f32.mrf.mxu0
    %v425 = vadd.f32 0.0, %v424
    %426 = vmatmul.f32.gmra.mxu0 %v354
    %v427 = vpop.f32.mrf.mxu0
    %v428 = vadd.f32 0.0, %v427
    %429 = vmatmul.f32.gmra.mxu0 %v355
    %v430 = vpop.f32.mrf.mxu0
    %v431 = vadd.f32 0.0, %v430
    %432 = vmatmul.f32.gmra.mxu0 %v356
    %v433 = vpop.f32.mrf.mxu0
    %v434 = vadd.f32 0.0, %v433
    %435 = vmatmul.f32.gmra.mxu0 %v357
    %v436 = vpop.f32.mrf.mxu0
    %v437 = vadd.f32 0.0, %v436
    %438 = vmatmul.f32.gmra.mxu0 %v358
    %v439 = vpop.f32.mrf.mxu0
    %v440 = vadd.f32 0.0, %v439
    %441 = vmatmul.f32.gmra.mxu0 %v359
    %v442 = vpop.f32.mrf.mxu0
    %v443 = vadd.f32 0.0, %v442
    %444 = vmatmul.f32.gmra.mxu0 %v360
    %v445 = vpop.f32.mrf.mxu0
    %v446 = vadd.f32 0.0, %v445
    %447 = vmatmul.f32.gmra.mxu0 %v361
    %v448 = vpop.f32.mrf.mxu0
    %v449 = vadd.f32 0.0, %v448
    %450 = vmatmul.f32.gmra.mxu0 %v362
    %v451 = vpop.f32.mrf.mxu0
    %v452 = vadd.f32 0.0, %v451
    %453 = vmatmul.f32.gmra.mxu0 %v363
    %v454 = vpop.f32.mrf.mxu0
    %v455 = vadd.f32 0.0, %v454
    %456 = vmatmul.f32.gmra.mxu0 %v364
    %v457 = vpop.f32.mrf.mxu0
    %v458 = vadd.f32 0.0, %v457
    %459 = vmatmul.f32.gmra.mxu0 %v365
    %v460 = vpop.f32.mrf.mxu0
    %v461 = vadd.f32 0.0, %v460
    %462 = vdwg.mxu0
    %463 = vmatpush.msra.mxu0 %v397
    %464 = vmatpush.msra.mxu0 %v395
    %465 = vmatpush.msra.mxu0 %v393
    %466 = vmatpush.msra.mxu0 %v391
    %467 = vmatpush.msra.mxu0 %v389
    %468 = vmatpush.msra.mxu0 %v387
    %469 = vmatpush.msra.mxu0 %v385
    %470 = vmatpush.msra.mxu0 %v383
    %471 = vmatpush.msra.mxu0 %v381
    %472 = vmatpush.msra.mxu0 %v379
    %473 = vmatpush.msra.mxu0 %v377
    %474 = vmatpush.msra.mxu0 %v375
    %475 = vmatpush.msra.mxu0 %v373
    %476 = vmatpush.msra.mxu0 %v371
    %477 = vmatpush.msra.mxu0 %v369
    %478 = vmatpush.msra.mxu0 %v367
    %479 = vmatmul.f32.gmra.mxu0 %v350
    %v480 = vpop.f32.mrf.mxu0
    %v481 = vadd.f32 0.0, %v480
    %482 = vmatmul.f32.gmra.mxu0 %v351
    %v483 = vpop.f32.mrf.mxu0
    %v484 = vadd.f32 0.0, %v483
    %485 = vmatmul.f32.gmra.mxu0 %v352
    %v486 = vpop.f32.mrf.mxu0
    %v487 = vadd.f32 0.0, %v486
    %488 = vmatmul.f32.gmra.mxu0 %v353
    %v489 = vpop.f32.mrf.mxu0
    %v490 = vadd.f32 0.0, %v489
    %491 = vmatmul.f32.gmra.mxu0 %v354
    %v492 = vpop.f32.mrf.mxu0
    %v493 = vadd.f32 0.0, %v492
    %494 = vmatmul.f32.gmra.mxu0 %v355
    %v495 = vpop.f32.mrf.mxu0
    %v496 = vadd.f32 0.0, %v495
    %497 = vmatmul.f32.gmra.mxu0 %v356
    %v498 = vpop.f32.mrf.mxu0
    %v499 = vadd.f32 0.0, %v498
    %500 = vmatmul.f32.gmra.mxu0 %v357
    %v501 = vpop.f32.mrf.mxu0
    %v502 = vadd.f32 0.0, %v501
    %503 = vmatmul.f32.gmra.mxu0 %v358
    %v504 = vpop.f32.mrf.mxu0
    %v505 = vadd.f32 0.0, %v504
    %506 = vmatmul.f32.gmra.mxu0 %v359
    %v507 = vpop.f32.mrf.mxu0
    %v508 = vadd.f32 0.0, %v507
    %509 = vmatmul.f32.gmra.mxu0 %v360
    %v510 = vpop.f32.mrf.mxu0
    %v511 = vadd.f32 0.0, %v510
    %512 = vmatmul.f32.gmra.mxu0 %v361
    %v513 = vpop.f32.mrf.mxu0
    %v514 = vadd.f32 0.0, %v513
    %515 = vmatmul.f32.gmra.mxu0 %v362
    %v516 = vpop.f32.mrf.mxu0
    %v517 = vadd.f32 0.0, %v516
    %518 = vmatmul.f32.gmra.mxu0 %v363
    %v519 = vpop.f32.mrf.mxu0
    %v520 = vadd.f32 0.0, %v519
    %521 = vmatmul.f32.gmra.mxu0 %v364
    %v522 = vpop.f32.mrf.mxu0
    %v523 = vadd.f32 0.0, %v522
    %524 = vmatmul.f32.gmra.mxu0 %v365
    %v525 = vpop.f32.mrf.mxu0
    %v526 = vadd.f32 0.0, %v525
    %527 = vdwg.mxu0
    %528 = vmatpush.msra.mxu0 %v526
    %529 = vmatpush.msra.mxu0 %v523
    %530 = vmatpush.msra.mxu0 %v520
    %531 = vmatpush.msra.mxu0 %v517
    %532 = vmatpush.msra.mxu0 %v514
    %533 = vmatpush.msra.mxu0 %v511
    %534 = vmatpush.msra.mxu0 %v508
    %535 = vmatpush.msra.mxu0 %v505
    %536 = vmatpush.msra.mxu0 %v502
    %537 = vmatpush.msra.mxu0 %v499
    %538 = vmatpush.msra.mxu0 %v496
    %539 = vmatpush.msra.mxu0 %v493
    %540 = vmatpush.msra.mxu0 %v490
    %541 = vmatpush.msra.mxu0 %v487
    %542 = vmatpush.msra.mxu0 %v484
    %543 = vmatpush.msra.mxu0 %v481
    %544 = vmatmul.f32.gmra.mxu0 %v87
    %v545 = vpop.f32.mrf.mxu0
    %v546 = vadd.f32 0.0, %v545
    %547 = vmatmul.f32.gmra.mxu0 %v88
    %v548 = vpop.f32.mrf.mxu0
    %v549 = vadd.f32 0.0, %v548
    %550 = vmatmul.f32.gmra.mxu0 %v89
    %v551 = vpop.f32.mrf.mxu0
    %v552 = vadd.f32 0.0, %v551
    %553 = vmatmul.f32.gmra.mxu0 %v90
    %v554 = vpop.f32.mrf.mxu0
    %v555 = vadd.f32 0.0, %v554
    %556 = vmatmul.f32.gmra.mxu0 %v91
    %v557 = vpop.f32.mrf.mxu0
    %v558 = vadd.f32 0.0, %v557
    %559 = vmatmul.f32.gmra.mxu0 %v92
    %v560 = vpop.f32.mrf.mxu0
    %v561 = vadd.f32 0.0, %v560
    %562 = vmatmul.f32.gmra.mxu0 %v93
    %v563 = vpop.f32.mrf.mxu0
    %v564 = vadd.f32 0.0, %v563
    %565 = vmatmul.f32.gmra.mxu0 %v94
    %v566 = vpop.f32.mrf.mxu0
    %v567 = vadd.f32 0.0, %v566
    %568 = vmatmul.f32.gmra.mxu0 %v95
    %v569 = vpop.f32.mrf.mxu0
    %v570 = vadd.f32 0.0, %v569
    %571 = vmatmul.f32.gmra.mxu0 %v96
    %v572 = vpop.f32.mrf.mxu0
    %v573 = vadd.f32 0.0, %v572
    %574 = vmatmul.f32.gmra.mxu0 %v97
    %v575 = vpop.f32.mrf.mxu0
    %v576 = vadd.f32 0.0, %v575
    %577 = vmatmul.f32.gmra.mxu0 %v98
    %v578 = vpop.f32.mrf.mxu0
    %v579 = vadd.f32 0.0, %v578
    %580 = vmatmul.f32.gmra.mxu0 %v99
    %v581 = vpop.f32.mrf.mxu0
    %v582 = vadd.f32 0.0, %v581
    %583 = vmatmul.f32.gmra.mxu0 %v100
    %v584 = vpop.f32.mrf.mxu0
    %v585 = vadd.f32 0.0, %v584
    %586 = vmatmul.f32.gmra.mxu0 %v101
    %v587 = vpop.f32.mrf.mxu0
    %v588 = vadd.f32 0.0, %v587
    %589 = vmatmul.f32.gmra.mxu0 %v102
    %v590 = vpop.f32.mrf.mxu0
    %v591 = vadd.f32 0.0, %v590
    %592 = vdwg.mxu0
    %v593 = vadd.f32 %v416, %v546
    %v594 = vadd.f32 %v419, %v549
    %v595 = vadd.f32 %v422, %v552
    %v596 = vadd.f32 %v425, %v555
    %v597 = vadd.f32 %v428, %v558
    %v598 = vadd.f32 %v431, %v561
    %v599 = vadd.f32 %v434, %v564
    %v600 = vadd.f32 %v437, %v567
    %v601 = vadd.f32 %v440, %v570
    %v602 = vadd.f32 %v443, %v573
    %v603 = vadd.f32 %v446, %v576
    %v604 = vadd.f32 %v449, %v579
    %v605 = vadd.f32 %v452, %v582
    %v606 = vadd.f32 %v455, %v585
    %v607 = vadd.f32 %v458, %v588
    %v608 = vadd.f32 %v461, %v591
    %v609 = vld [vmem:[%s5] sm:$0x1]
    %v611 = vperm.slane %v609, 0
    %v613 = vadd.f32 %v593, %v611
    %v614 = vadd.f32 %v594, %v611
    %v615 = vadd.f32 %v595, %v611
    %v616 = vadd.f32 %v596, %v611
    %v617 = vadd.f32 %v597, %v611
    %v618 = vadd.f32 %v598, %v611
    %v619 = vadd.f32 %v599, %v611
    %v620 = vadd.f32 %v600, %v611
    %v621 = vadd.f32 %v601, %v611
    %v622 = vadd.f32 %v602, %v611
    %v623 = vadd.f32 %v603, %v611
    %v624 = vadd.f32 %v604, %v611
    %v625 = vadd.f32 %v605, %v611
    %v626 = vadd.f32 %v606, %v611
    %v627 = vadd.f32 %v607, %v611
    %v628 = vadd.f32 %v608, %v611
    %629 = vst [vmem:[#allocation10] sm:$0xff] %v613
    %630 = vst [vmem:[#allocation10 + $0x8] sm:$0xff] %v614
    %631 = vst [vmem:[#allocation10 + $0x10] sm:$0xff] %v615
    %632 = vst [vmem:[#allocation10 + $0x18] sm:$0xff] %v616
    %633 = vst [vmem:[#allocation10 + $0x20] sm:$0xff] %v617
    %634 = vst [vmem:[#allocation10 + $0x28] sm:$0xff] %v618
    %635 = vst [vmem:[#allocation10 + $0x30] sm:$0xff] %v619
    %636 = vst [vmem:[#allocation10 + $0x38] sm:$0xff] %v620
    %637 = vst [vmem:[#allocation10 + $0x40] sm:$0xff] %v621
    %638 = vst [vmem:[#allocation10 + $0x48] sm:$0xff] %v622
    %639 = vst [vmem:[#allocation10 + $0x50] sm:$0xff] %v623
    %640 = vst [vmem:[#allocation10 + $0x58] sm:$0xff] %v624
    %641 = vst [vmem:[#allocation10 + $0x60] sm:$0xff] %v625
    %642 = vst [vmem:[#allocation10 + $0x68] sm:$0xff] %v626
    %643 = vst [vmem:[#allocation10 + $0x70] sm:$0xff] %v627
    %644 = vst [vmem:[#allocation10 + $0x78] sm:$0xff] %v628
    // Predicated region
    $region42: #{tpu_custom_call.1} parent=1 // pred_check
      _
    $region43: #{tpu_custom_call.1} parent=1 // pred_check_branch
      %646 = sbr.rel (0) target = $region45
    $region44: #{tpu_custom_call.1} parent=1 // pred_region
      %648 = vsyncadd [#allocation4], 0
      %s649 = sshll.u32 [#allocation10], 4
      %s650 = int_to_ptr.vmem [resolvable:$true] %s649
      %s651 = sshll.u32 %s6, 4
      %s652 = int_to_ptr.hbm [resolvable:$true] %s651
      %657 = dma.vmem_to_hbm [thread:$0]  %s650, 2048, %s652, [#allocation4], 128, 128, 8
    $region45: #{tpu_custom_call.1} parent=1 // pred_fallthru
      _
    // Predicated region
    $region46: #{tpu_custom_call.1} parent=1 // pred_check
      _
    $region47: #{tpu_custom_call.1} parent=1 // pred_check_branch
      %659 = sbr.rel (0) target = $region49
    $region48: #{tpu_custom_call.1} parent=1 // pred_region
      %661 = dma.done [#allocation4], 2048
    $region49: #{tpu_custom_call.1} parent=1 // pred_fallthru
      _
    %662 = vsyncpa [#allocation3], 1
    %663 = vsyncpa [#allocation6], 1
    %664 = vsyncpa [#allocation9], 1
    %665 = vsyncpa [#allocation4], 1

</llo_original>
